<compile_context>
chip_gen: v7x
topology: tpu7x:2x2x1
jax: 0.10.0
libtpu: 0.0.40
codegen_flags: <defaults>
</compile_context>

<pallas_src>
import jax
import jax.numpy as jnp
from jax.experimental import pallas as pl
from jax.experimental.pallas import tpu as pltpu

IN_FEATURES = 784
HIDDEN = 64
OUT_FEATURES = 10

HIDDEN_PAD = 128        # lane-dense hidden width
OUT_PAD = 128           # lane-dense logit width
NEG_INF_BIAS = -1e30    # mask value for padded logit columns
DEFAULT_TILE_B = 1024   # batch rows per grid step (safe on v7x 64 MiB VMEM)


def _round_up(n, m):
    return ((n + m - 1) // m) * m


def mlp_kernel(x_ref,
               w1_ref, b1_ref,
               w2_ref, b2_ref,
               w3_ref, b3_ref,
               w4_ref, b4_ref,
               out_ref):
    """One batch tile: fc1..fc4 + ReLUs + log_softmax, entirely in VMEM."""
    x = x_ref[...]                                              # (TB, 784) bf16

    # fc1 + ReLU (bf16 MXU matmul, f32 accumulate)
    h = jnp.dot(x, w1_ref[...], preferred_element_type=jnp.float32) + b1_ref[...]
    h = jnp.maximum(h, 0.0).astype(jnp.bfloat16)

    # fc2 + ReLU
    h = jnp.dot(h, w2_ref[...], preferred_element_type=jnp.float32) + b2_ref[...]
    h = jnp.maximum(h, 0.0).astype(jnp.bfloat16)

    # fc3 + ReLU
    h = jnp.dot(h, w3_ref[...], preferred_element_type=jnp.float32) + b3_ref[...]
    h = jnp.maximum(h, 0.0).astype(jnp.bfloat16)

    # fc4 (logits).  Padded logit columns carry a -1e30 bias, so after the
    # max-shift their exp underflows to exactly 0 -> correct normalizer over
    # the 10 real classes.
    logits = jnp.dot(h, w4_ref[...], preferred_element_type=jnp.float32) + b4_ref[...]

    # numerically stable log_softmax over the (lane-dense) class axis, in f32
    m = jnp.max(logits, axis=1, keepdims=True)
    shifted = logits - m
    lse = jnp.log(jnp.sum(jnp.exp(shifted), axis=1, keepdims=True))
    out_ref[...] = shifted - lse


def _prepare_params(params):
    """Pad to lane-dense widths and cast weights to bf16 (biases stay f32)."""
    def pad_w(w, rows, cols):
        r, c = w.shape
        return jnp.pad(w, ((0, rows - r), (0, cols - c))).astype(jnp.bfloat16)

    def pad_b(b, cols, fill=0.0):
        b = b.reshape(1, -1).astype(jnp.float32)
        return jnp.pad(b, ((0, 0), (0, cols - b.shape[1])), constant_values=fill)

    w1 = pad_w(params["w1"], IN_FEATURES, HIDDEN_PAD)
    w2 = pad_w(params["w2"], HIDDEN_PAD, HIDDEN_PAD)
    w3 = pad_w(params["w3"], HIDDEN_PAD, HIDDEN_PAD)
    w4 = pad_w(params["w4"], HIDDEN_PAD, OUT_PAD)
    b1 = pad_b(params["b1"], HIDDEN_PAD)
    b2 = pad_b(params["b2"], HIDDEN_PAD)
    b3 = pad_b(params["b3"], HIDDEN_PAD)
    b4 = pad_b(params["b4"], OUT_PAD, fill=NEG_INF_BIAS)
    return w1, b1, w2, b2, w3, b3, w4, b4


def net_forward(x, params, *, tile_b=DEFAULT_TILE_B):
    """x: (B, 784) float32; params: dict of unpadded f32 weights/biases."""
    B = x.shape[0]
    assert x.shape[1] == IN_FEATURES

    # Batch tile: multiple of 8 sublanes, capped at tile_b (VMEM-safe on v7x).
    tb = min(tile_b, _round_up(max(B, 8), 8))
    b_padded = _round_up(B, tb)
    if b_padded != B:
        x = jnp.pad(x, ((0, b_padded - B), (0, 0)))
    x = x.astype(jnp.bfloat16)

    w1, b1, w2, b2, w3, b3, w4, b4 = _prepare_params(params)

    # Constant index_map -> weights/biases stay resident in VMEM across steps.
    def resident(a):
        return pl.BlockSpec(a.shape, lambda i: (0,) * a.ndim)

    out = pl.pallas_call(
        mlp_kernel,
        out_shape=jax.ShapeDtypeStruct((b_padded, OUT_PAD), jnp.float32),
        grid=(b_padded // tb,),
        in_specs=[pl.BlockSpec((tb, IN_FEATURES), lambda i: (i, 0)),
                  resident(w1), resident(b1),
                  resident(w2), resident(b2),
                  resident(w3), resident(b3),
                  resident(w4), resident(b4)],
        out_specs=pl.BlockSpec((tb, OUT_PAD), lambda i: (i, 0)),
        compiler_params=pltpu.CompilerParams(
            dimension_semantics=("parallel",)),
    )(x, w1, b1, w2, b2, w3, b3, w4, b4)

    return out[:B, :OUT_FEATURES]


def init_params(key):
    """Deterministic init mimicking nn.Linear default (uniform +/- 1/sqrt(fan_in))."""
    dims = [(IN_FEATURES, HIDDEN), (HIDDEN, HIDDEN),
            (HIDDEN, HIDDEN), (HIDDEN, OUT_FEATURES)]
    params = {}
    for i, (fan_in, fan_out) in enumerate(dims, start=1):
        key, kw, kb = jax.random.split(key, 3)
        bound = 1.0 / jnp.sqrt(fan_in)
        params[f"w{i}"] = jax.random.uniform(
            kw, (fan_in, fan_out), jnp.float32, -bound, bound)
        params[f"b{i}"] = jax.random.uniform(
            kb, (1, fan_out), jnp.float32, -bound, bound)
    return params


def reference_forward(x, params):
    """Plain-JAX f32 reference matching the PyTorch module."""
    h = jnp.maximum(x @ params["w1"] + params["b1"], 0.0)
    h = jnp.maximum(h @ params["w2"] + params["b2"], 0.0)
    h = jnp.maximum(h @ params["w3"] + params["b3"], 0.0)
    logits = h @ params["w4"] + params["b4"]
    return jax.nn.log_softmax(logits, axis=1)


if __name__ == "__main__":
    key = jax.random.PRNGKey(0)
    key, kx = jax.random.split(key)

    B = 8
    x = jax.random.normal(kx, (B, IN_FEATURES), dtype=jnp.float32)
    params = init_params(key)

    out = net_forward(x, params)
    out = jax.block_until_ready(out)

    ref = reference_forward(x, params)
    assert out.shape == (B, OUT_FEATURES)
    # Kernel uses bf16 activations/weights -> loose tolerance vs f32 reference.
    assert jnp.allclose(out, ref, atol=5e-2, rtol=5e-2), "mismatch vs reference"
    # rows of log_softmax should exp-sum to 1 (padded classes contribute 0)
    assert jnp.allclose(jnp.sum(jnp.exp(out), axis=1), 1.0, atol=1e-4)

    print("KERNEL_OK")
</pallas_src>

<mosaic_0001>
module attributes {stable_mosaic.version = 11 : i64} {
  func.func @mlp_kernel(%arg0: i32, %arg1: memref<8x784xbf16, #tpu.memory_space<vmem>>, %arg2: memref<784x128xbf16, #tpu.memory_space<vmem>>, %arg3: memref<1x128xf32, #tpu.memory_space<vmem>>, %arg4: memref<128x128xbf16, #tpu.memory_space<vmem>>, %arg5: memref<1x128xf32, #tpu.memory_space<vmem>>, %arg6: memref<128x128xbf16, #tpu.memory_space<vmem>>, %arg7: memref<1x128xf32, #tpu.memory_space<vmem>>, %arg8: memref<128x128xbf16, #tpu.memory_space<vmem>>, %arg9: memref<1x128xf32, #tpu.memory_space<vmem>>, %arg10: memref<8x128xf32, #tpu.memory_space<vmem>>) attributes {dimension_semantics = [#tpu.dimension_semantics<parallel>], iteration_bounds = array<i64: 1>, scalar_prefetch = 0 : i64, scratch_operands = 0 : i64, tpu.core_type = #tpu.core_type<tc>, window_params = [{transform_indices = @transform_0, window_bounds = array<i64: 8, 784>}, {pipeline_mode = #tpu.pipeline_mode<synchronous>, transform_indices = @transform_1, window_bounds = array<i64: 784, 128>}, {pipeline_mode = #tpu.pipeline_mode<synchronous>, transform_indices = @transform_2, window_bounds = array<i64: 1, 128>}, {pipeline_mode = #tpu.pipeline_mode<synchronous>, transform_indices = @transform_3, window_bounds = array<i64: 128, 128>}, {pipeline_mode = #tpu.pipeline_mode<synchronous>, transform_indices = @transform_4, window_bounds = array<i64: 1, 128>}, {pipeline_mode = #tpu.pipeline_mode<synchronous>, transform_indices = @transform_5, window_bounds = array<i64: 128, 128>}, {pipeline_mode = #tpu.pipeline_mode<synchronous>, transform_indices = @transform_6, window_bounds = array<i64: 1, 128>}, {pipeline_mode = #tpu.pipeline_mode<synchronous>, transform_indices = @transform_7, window_bounds = array<i64: 128, 128>}, {pipeline_mode = #tpu.pipeline_mode<synchronous>, transform_indices = @transform_8, window_bounds = array<i64: 1, 128>}, {transform_indices = @transform_9, window_bounds = array<i64: 8, 128>}]} {
    %c0 = arith.constant 0 : index
    %c0_0 = arith.constant 0 : index
    %0 = vector.load %arg1[%c0, %c0_0] : memref<8x784xbf16, #tpu.memory_space<vmem>>, vector<8x784xbf16>
    %c0_1 = arith.constant 0 : index
    %c0_2 = arith.constant 0 : index
    %1 = vector.load %arg2[%c0_1, %c0_2] : memref<784x128xbf16, #tpu.memory_space<vmem>>, vector<784x128xbf16>
    %cst = arith.constant dense<0.000000e+00> : vector<8x128xf32>
    %2 = tpu.matmul %0, %1, %cst {dimension_numbers = #tpu.dot_dimension_numbers<[1], [0], [0], [1], [0, 0, 1, 1], [], []>} : vector<8x784xbf16>, vector<784x128xbf16>, vector<8x128xf32> -> vector<8x128xf32>
    %c0_3 = arith.constant 0 : index
    %c0_4 = arith.constant 0 : index
    %3 = vector.load %arg3[%c0_3, %c0_4] : memref<1x128xf32, #tpu.memory_space<vmem>>, vector<1x128xf32>
    %4 = vector.broadcast %3 : vector<1x128xf32> to vector<8x128xf32>
    %5 = arith.addf %2, %4 : vector<8x128xf32>
    %cst_5 = arith.constant 0.000000e+00 : f32
    %6 = vector.broadcast %cst_5 : f32 to vector<8x128xf32>
    %7 = arith.maximumf %5, %6 : vector<8x128xf32>
    %8 = arith.truncf %7 : vector<8x128xf32> to vector<8x128xbf16>
    %c0_6 = arith.constant 0 : index
    %c0_7 = arith.constant 0 : index
    %9 = vector.load %arg4[%c0_6, %c0_7] : memref<128x128xbf16, #tpu.memory_space<vmem>>, vector<128x128xbf16>
    %cst_8 = arith.constant dense<0.000000e+00> : vector<8x128xf32>
    %10 = tpu.matmul %8, %9, %cst_8 {dimension_numbers = #tpu.dot_dimension_numbers<[1], [0], [0], [1], [0, 0, 1, 1], [], []>} : vector<8x128xbf16>, vector<128x128xbf16>, vector<8x128xf32> -> vector<8x128xf32>
    %c0_9 = arith.constant 0 : index
    %c0_10 = arith.constant 0 : index
    %11 = vector.load %arg5[%c0_9, %c0_10] : memref<1x128xf32, #tpu.memory_space<vmem>>, vector<1x128xf32>
    %12 = vector.broadcast %11 : vector<1x128xf32> to vector<8x128xf32>
    %13 = arith.addf %10, %12 : vector<8x128xf32>
    %cst_11 = arith.constant 0.000000e+00 : f32
    %14 = vector.broadcast %cst_11 : f32 to vector<8x128xf32>
    %15 = arith.maximumf %13, %14 : vector<8x128xf32>
    %16 = arith.truncf %15 : vector<8x128xf32> to vector<8x128xbf16>
    %c0_12 = arith.constant 0 : index
    %c0_13 = arith.constant 0 : index
    %17 = vector.load %arg6[%c0_12, %c0_13] : memref<128x128xbf16, #tpu.memory_space<vmem>>, vector<128x128xbf16>
    %cst_14 = arith.constant dense<0.000000e+00> : vector<8x128xf32>
    %18 = tpu.matmul %16, %17, %cst_14 {dimension_numbers = #tpu.dot_dimension_numbers<[1], [0], [0], [1], [0, 0, 1, 1], [], []>} : vector<8x128xbf16>, vector<128x128xbf16>, vector<8x128xf32> -> vector<8x128xf32>
    %c0_15 = arith.constant 0 : index
    %c0_16 = arith.constant 0 : index
    %19 = vector.load %arg7[%c0_15, %c0_16] : memref<1x128xf32, #tpu.memory_space<vmem>>, vector<1x128xf32>
    %20 = vector.broadcast %19 : vector<1x128xf32> to vector<8x128xf32>
    %21 = arith.addf %18, %20 : vector<8x128xf32>
    %cst_17 = arith.constant 0.000000e+00 : f32
    %22 = vector.broadcast %cst_17 : f32 to vector<8x128xf32>
    %23 = arith.maximumf %21, %22 : vector<8x128xf32>
    %24 = arith.truncf %23 : vector<8x128xf32> to vector<8x128xbf16>
    %c0_18 = arith.constant 0 : index
    %c0_19 = arith.constant 0 : index
    %25 = vector.load %arg8[%c0_18, %c0_19] : memref<128x128xbf16, #tpu.memory_space<vmem>>, vector<128x128xbf16>
    %cst_20 = arith.constant dense<0.000000e+00> : vector<8x128xf32>
    %26 = tpu.matmul %24, %25, %cst_20 {dimension_numbers = #tpu.dot_dimension_numbers<[1], [0], [0], [1], [0, 0, 1, 1], [], []>} : vector<8x128xbf16>, vector<128x128xbf16>, vector<8x128xf32> -> vector<8x128xf32>
    %c0_21 = arith.constant 0 : index
    %c0_22 = arith.constant 0 : index
    %27 = vector.load %arg9[%c0_21, %c0_22] : memref<1x128xf32, #tpu.memory_space<vmem>>, vector<1x128xf32>
    %28 = vector.broadcast %27 : vector<1x128xf32> to vector<8x128xf32>
    %29 = arith.addf %26, %28 : vector<8x128xf32>
    %cst_23 = arith.constant dense<0xFF800000> : vector<8xf32>
    %30 = vector.multi_reduction <maximumf>, %29, %cst_23 [1] : vector<8x128xf32> to vector<8xf32>
    %31 = vector.shape_cast %30 : vector<8xf32> to vector<8x1xf32>
    %32 = vector.broadcast %31 : vector<8x1xf32> to vector<8x128xf32>
    %33 = arith.subf %29, %32 : vector<8x128xf32>
    %34 = math.exp %33 : vector<8x128xf32>
    %cst_24 = arith.constant dense<0.000000e+00> : vector<8xf32>
    %35 = vector.multi_reduction <add>, %34, %cst_24 [1] : vector<8x128xf32> to vector<8xf32>
    %36 = vector.shape_cast %35 : vector<8xf32> to vector<8x1xf32>
    %37 = math.log %36 : vector<8x1xf32>
    %38 = vector.broadcast %37 : vector<8x1xf32> to vector<8x128xf32>
    %39 = arith.subf %33, %38 : vector<8x128xf32>
    %c0_25 = arith.constant 0 : index
    %c0_26 = arith.constant 0 : index
    %40 = vector.load %arg10[%c0_25, %c0_26] : memref<8x128xf32, #tpu.memory_space<vmem>>, vector<8x128xf32>
    tpu.vector_store %arg10[%c0_25, %c0_26], %39 {strides = array<i32>} : memref<8x128xf32, #tpu.memory_space<vmem>>, vector<8x128xf32>,
    return
  }
  func.func @transform_0(%arg0: i32) -> (i32, i32) {
    %c0_i32 = arith.constant 0 : i32
    %c0_i32_0 = arith.constant 0 : i32
    return %arg0, %c0_i32 : i32, i32
  }
  func.func @transform_1(%arg0: i32) -> (i32, i32) {
    %c0_i32 = arith.constant 0 : i32
    %c0_i32_0 = arith.constant 0 : i32
    %c0_i32_1 = arith.constant 0 : i32
    return %c0_i32, %c0_i32_0 : i32, i32
  }
  func.func @transform_2(%arg0: i32) -> (i32, i32) {
    %c0_i32 = arith.constant 0 : i32
    %c0_i32_0 = arith.constant 0 : i32
    %c0_i32_1 = arith.constant 0 : i32
    return %c0_i32, %c0_i32_0 : i32, i32
  }
  func.func @transform_3(%arg0: i32) -> (i32, i32) {
    %c0_i32 = arith.constant 0 : i32
    %c0_i32_0 = arith.constant 0 : i32
    %c0_i32_1 = arith.constant 0 : i32
    return %c0_i32, %c0_i32_0 : i32, i32
  }
  func.func @transform_4(%arg0: i32) -> (i32, i32) {
    %c0_i32 = arith.constant 0 : i32
    %c0_i32_0 = arith.constant 0 : i32
    %c0_i32_1 = arith.constant 0 : i32
    return %c0_i32, %c0_i32_0 : i32, i32
  }
  func.func @transform_5(%arg0: i32) -> (i32, i32) {
    %c0_i32 = arith.constant 0 : i32
    %c0_i32_0 = arith.constant 0 : i32
    %c0_i32_1 = arith.constant 0 : i32
    return %c0_i32, %c0_i32_0 : i32, i32
  }
  func.func @transform_6(%arg0: i32) -> (i32, i32) {
    %c0_i32 = arith.constant 0 : i32
    %c0_i32_0 = arith.constant 0 : i32
    %c0_i32_1 = arith.constant 0 : i32
    return %c0_i32, %c0_i32_0 : i32, i32
  }
  func.func @transform_7(%arg0: i32) -> (i32, i32) {
    %c0_i32 = arith.constant 0 : i32
    %c0_i32_0 = arith.constant 0 : i32
    %c0_i32_1 = arith.constant 0 : i32
    return %c0_i32, %c0_i32_0 : i32, i32
  }
  func.func @transform_8(%arg0: i32) -> (i32, i32) {
    %c0_i32 = arith.constant 0 : i32
    %c0_i32_0 = arith.constant 0 : i32
    %c0_i32_1 = arith.constant 0 : i32
    return %c0_i32, %c0_i32_0 : i32, i32
  }
  func.func @transform_9(%arg0: i32) -> (i32, i32) {
    %c0_i32 = arith.constant 0 : i32
    %c0_i32_0 = arith.constant 0 : i32
    return %arg0, %c0_i32 : i32, i32
  }
}

</mosaic_0001>

<llo_original>
// kernel: tpu_custom_call.1
$region0: #{tpu_custom_call.1}
  #allocation0 [shape = 'u32[]', space=smem, size = 0x4, offset = 0x4, fixed_abs, tag = 'smem constant byte address 0x4 - core index']
  #allocation1 [shape = 'u32[144,128]{1,0:T(1,128)}', space=vmem, size = 0x12000, scoped, tag = 'internal scratch']
  %s0 = inlined_call_operand.hbm [shape: bf16[8,784], index: 0, kind: input, shape index: {}]
  %s1 = inlined_call_operand.hbm [shape: bf16[784,128], index: 1, kind: input, shape index: {}]
  %s2 = inlined_call_operand.vmem [shape: f32[1,128], index: 2, kind: input, shape index: {}]
  %s3 = inlined_call_operand.hbm [shape: bf16[128,128], index: 3, kind: input, shape index: {}]
  %s4 = inlined_call_operand.vmem [shape: f32[1,128], index: 4, kind: input, shape index: {}]
  %s5 = inlined_call_operand.hbm [shape: bf16[128,128], index: 5, kind: input, shape index: {}]
  %s6 = inlined_call_operand.vmem [shape: f32[1,128], index: 6, kind: input, shape index: {}]
  %s7 = inlined_call_operand.hbm [shape: bf16[128,128], index: 7, kind: input, shape index: {}]
  %s8 = inlined_call_operand.vmem [shape: f32[1,128], index: 8, kind: input, shape index: {}]
  %s9 = inlined_call_operand.hbm [shape: f32[8,128], index: 9, kind: output, shape index: {}]
  %s10 = sld [smem:[#allocation0]]
  $region66: #{tpu_custom_call.1} parent=0
    _
  %s12 = ssub.s32 1, %s10
  %s13 = scalar_select 0, %s12, %s10
  $region1: #{tpu_custom_call.1} parent=0
    #allocation2 [shape = 'u8[14336]{0}', space=vmem, size = 0x3800, scoped, tag = 'input window, operand 0, single buffered']
    #allocation3 [shape = 's32[1]{0}', space=sflag, size = 0x4, scoped, tag = 'scoped memory for tpu_custom_call.1']
    #allocation4 [shape = 's32[1]{0}', space=sflag, size = 0x4, scoped, tag = 'scoped memory for tpu_custom_call.1']
    #allocation5 [shape = 'u8[200704]{0}', space=vmem, size = 0x31000, scoped, tag = 'input window, operand 1, single buffered']
    #allocation6 [shape = 's32[1]{0}', space=sflag, size = 0x4, scoped, tag = 'scoped memory for tpu_custom_call.1']
    #allocation7 [shape = 'u8[32768]{0}', space=vmem, size = 0x8000, scoped, tag = 'input window, operand 3, single buffered']
    #allocation8 [shape = 'u8[32768]{0}', space=vmem, size = 0x8000, scoped, tag = 'input window, operand 5, single buffered']
    #allocation9 [shape = 's32[1]{0}', space=sflag, size = 0x4, scoped, tag = 'scoped memory for tpu_custom_call.1']
    #allocation10 [shape = 'u8[32768]{0}', space=vmem, size = 0x8000, scoped, tag = 'input window, operand 7, single buffered']
    #allocation11 [shape = 'u8[4096]{0}', space=vmem, size = 0x1000, scoped, tag = 'output window, operand 0, single buffered']
    %14 = vsyncpa [#allocation3], 0
    %15 = vsyncpa [#allocation6], 0
    %16 = vsyncpa [#allocation9], 0
    %17 = vsyncpa [#allocation4], 0
    // Predicated region
    $region2: #{tpu_custom_call.1} parent=1 // pred_check
      _
    $region3: #{tpu_custom_call.1} parent=1 // pred_check_branch
      %19 = sbr.rel (0) target = $region5
    $region4: #{tpu_custom_call.1} parent=1 // pred_region
      %s21 = ssub.s32 448, 448
      %22 = vsyncadd [#allocation3], %s21
      %s24 = sshll.u32 [#allocation2], 4
      %s25 = int_to_ptr.vmem [resolvable:$true] %s24
      %27 = dma.hbm_to_vmem [thread:$0]  %s0, 448, %s25, [#allocation3]
    $region5: #{tpu_custom_call.1} parent=1 // pred_fallthru
      _
    // Predicated region
    $region6: #{tpu_custom_call.1} parent=1 // pred_check
      _
    $region7: #{tpu_custom_call.1} parent=1 // pred_check_branch
      %29 = sbr.rel (0) target = $region9
    $region8: #{tpu_custom_call.1} parent=1 // pred_region
      %s31 = ssub.s32 6272, 6272
      %32 = vsyncadd [#allocation6], %s31
      %s33 = sshll.u32 [#allocation5], 4
      %s34 = int_to_ptr.vmem [resolvable:$true] %s33
      %39 = dma.hbm_to_vmem [thread:$0]  %s1, 6272, %s34, [#allocation6], 64, 64, 4
    $region9: #{tpu_custom_call.1} parent=1 // pred_fallthru
      _
    // Predicated region
    $region10: #{tpu_custom_call.1} parent=1 // pred_check
      _
    $region11: #{tpu_custom_call.1} parent=1 // pred_check_branch
      %41 = sbr.rel (0) target = $region13
    $region12: #{tpu_custom_call.1} parent=1 // pred_region
      _
    $region13: #{tpu_custom_call.1} parent=1 // pred_fallthru
      _
    // Predicated region
    $region14: #{tpu_custom_call.1} parent=1 // pred_check
      _
    $region15: #{tpu_custom_call.1} parent=1 // pred_check_branch
      %43 = sbr.rel (0) target = $region17
    $region16: #{tpu_custom_call.1} parent=1 // pred_region
      %s45 = ssub.s32 1024, 1024
      %46 = vsyncadd [#allocation6], %s45
      %s47 = sshll.u32 [#allocation7], 4
      %s48 = int_to_ptr.vmem [resolvable:$true] %s47
      %53 = dma.hbm_to_vmem [thread:$0]  %s3, 1024, %s48, [#allocation6], 64, 64, 4
    $region17: #{tpu_custom_call.1} parent=1 // pred_fallthru
      _
    // Predicated region
    $region18: #{tpu_custom_call.1} parent=1 // pred_check
      _
    $region19: #{tpu_custom_call.1} parent=1 // pred_check_branch
      %55 = sbr.rel (0) target = $region21
    $region20: #{tpu_custom_call.1} parent=1 // pred_region
      _
    $region21: #{tpu_custom_call.1} parent=1 // pred_fallthru
      _
    // Predicated region
    $region22: #{tpu_custom_call.1} parent=1 // pred_check
      _
    $region23: #{tpu_custom_call.1} parent=1 // pred_check_branch
      %57 = sbr.rel (0) target = $region25
    $region24: #{tpu_custom_call.1} parent=1 // pred_region
      %s59 = ssub.s32 1024, 1024
      %60 = vsyncadd [#allocation9], %s59
      %s61 = sshll.u32 [#allocation8], 4
      %s62 = int_to_ptr.vmem [resolvable:$true] %s61
      %67 = dma.hbm_to_vmem [thread:$0]  %s5, 1024, %s62, [#allocation9], 64, 64, 4
    $region25: #{tpu_custom_call.1} parent=1 // pred_fallthru
      _
    // Predicated region
    $region26: #{tpu_custom_call.1} parent=1 // pred_check
      _
    $region27: #{tpu_custom_call.1} parent=1 // pred_check_branch
      %69 = sbr.rel (0) target = $region29
    $region28: #{tpu_custom_call.1} parent=1 // pred_region
      _
    $region29: #{tpu_custom_call.1} parent=1 // pred_fallthru
      _
    // Predicated region
    $region30: #{tpu_custom_call.1} parent=1 // pred_check
      _
    $region31: #{tpu_custom_call.1} parent=1 // pred_check_branch
      %71 = sbr.rel (0) target = $region33
    $region32: #{tpu_custom_call.1} parent=1 // pred_region
      %s73 = ssub.s32 1024, 1024
      %74 = vsyncadd [#allocation9], %s73
      %s75 = sshll.u32 [#allocation10], 4
      %s76 = int_to_ptr.vmem [resolvable:$true] %s75
      %81 = dma.hbm_to_vmem [thread:$0]  %s7, 1024, %s76, [#allocation9], 64, 64, 4
    $region33: #{tpu_custom_call.1} parent=1 // pred_fallthru
      _
    // Predicated region
    $region34: #{tpu_custom_call.1} parent=1 // pred_check
      _
    $region35: #{tpu_custom_call.1} parent=1 // pred_check_branch
      %83 = sbr.rel (0) target = $region37
    $region36: #{tpu_custom_call.1} parent=1 // pred_region
      _
    $region37: #{tpu_custom_call.1} parent=1 // pred_fallthru
      _
    // Predicated region
    $region38: #{tpu_custom_call.1} parent=1 // pred_check
      _
    $region39: #{tpu_custom_call.1} parent=1 // pred_check_branch
      %85 = sbr.rel (0) target = $region41
    $region40: #{tpu_custom_call.1} parent=1 // pred_region
      %86 = dma.done [#allocation3], 448
    $region41: #{tpu_custom_call.1} parent=1 // pred_fallthru
      _
    // Predicated region
    $region42: #{tpu_custom_call.1} parent=1 // pred_check
      _
    $region43: #{tpu_custom_call.1} parent=1 // pred_check_branch
      %88 = sbr.rel (0) target = $region45
    $region44: #{tpu_custom_call.1} parent=1 // pred_region
      %89 = dma.done [#allocation6], 6272
    $region45: #{tpu_custom_call.1} parent=1 // pred_fallthru
      _
    // Predicated region
    $region46: #{tpu_custom_call.1} parent=1 // pred_check
      _
    $region47: #{tpu_custom_call.1} parent=1 // pred_check_branch
      %91 = sbr.rel (0) target = $region49
    $region48: #{tpu_custom_call.1} parent=1 // pred_region
      %92 = dma.done [#allocation6], 1024
    $region49: #{tpu_custom_call.1} parent=1 // pred_fallthru
      _
    // Predicated region
    $region50: #{tpu_custom_call.1} parent=1 // pred_check
      _
    $region51: #{tpu_custom_call.1} parent=1 // pred_check_branch
      %94 = sbr.rel (0) target = $region53
    $region52: #{tpu_custom_call.1} parent=1 // pred_region
      %95 = dma.done [#allocation9], 1024
    $region53: #{tpu_custom_call.1} parent=1 // pred_fallthru
      _
    // Predicated region
    $region54: #{tpu_custom_call.1} parent=1 // pred_check
      _
    $region55: #{tpu_custom_call.1} parent=1 // pred_check_branch
      %97 = sbr.rel (0) target = $region57
    $region56: #{tpu_custom_call.1} parent=1 // pred_region
      %98 = dma.done [#allocation9], 1024
    $region57: #{tpu_custom_call.1} parent=1 // pred_fallthru
      _
    %v100 = vld [vmem:[#allocation2] sm:$0xff]
    %v101 = vld [vmem:[#allocation2 + $0x8] sm:$0xff]
    %v102 = vld [vmem:[#allocation2 + $0x10] sm:$0xff]
    %v103 = vld [vmem:[#allocation2 + $0x18] sm:$0xf]
    %v104 = vld [vmem:[#allocation5] sm:$0xf]
    %v105 = vld [vmem:[#allocation5 + $0x4] sm:$0xf]
    %v106 = vld [vmem:[#allocation5 + $0x8] sm:$0xf]
    %v107 = vld [vmem:[#allocation5 + $0xc] sm:$0xf]
    %v108 = vld [vmem:[#allocation5 + $0x10] sm:$0xf]
    %v109 = vld [vmem:[#allocation5 + $0x14] sm:$0xf]
    %v110 = vld [vmem:[#allocation5 + $0x18] sm:$0xf]
    %v111 = vld [vmem:[#allocation5 + $0x1c] sm:$0xf]
    %v112 = vld [vmem:[#allocation5 + $0x20] sm:$0xf]
    %v113 = vld [vmem:[#allocation5 + $0x24] sm:$0xf]
    %v114 = vld [vmem:[#allocation5 + $0x28] sm:$0xf]
    %v115 = vld [vmem:[#allocation5 + $0x2c] sm:$0xf]
    %v116 = vld [vmem:[#allocation5 + $0x30] sm:$0xf]
    %v117 = vld [vmem:[#allocation5 + $0x34] sm:$0xf]
    %v118 = vld [vmem:[#allocation5 + $0x38] sm:$0xf]
    %v119 = vld [vmem:[#allocation5 + $0x3c] sm:$0xf]
    %v120 = vld [vmem:[#allocation5 + $0x40] sm:$0xf]
    %v121 = vld [vmem:[#allocation5 + $0x44] sm:$0xf]
    %v122 = vld [vmem:[#allocation5 + $0x48] sm:$0xf]
    %v123 = vld [vmem:[#allocation5 + $0x4c] sm:$0xf]
    %v124 = vld [vmem:[#allocation5 + $0x50] sm:$0xf]
    %v125 = vld [vmem:[#allocation5 + $0x54] sm:$0xf]
    %v126 = vld [vmem:[#allocation5 + $0x58] sm:$0xf]
    %v127 = vld [vmem:[#allocation5 + $0x5c] sm:$0xf]
    %v128 = vld [vmem:[#allocation5 + $0x60] sm:$0xf]
    %v129 = vld [vmem:[#allocation5 + $0x64] sm:$0xf]
    %v130 = vld [vmem:[#allocation5 + $0x68] sm:$0xf]
    %v131 = vld [vmem:[#allocation5 + $0x6c] sm:$0xf]
    %v132 = vld [vmem:[#allocation5 + $0x70] sm:$0xf]
    %v133 = vld [vmem:[#allocation5 + $0x74] sm:$0xf]
    %v134 = vld [vmem:[#allocation5 + $0x78] sm:$0xf]
    %v135 = vld [vmem:[#allocation5 + $0x7c] sm:$0xf]
    %v136 = vld [vmem:[#allocation5 + $0x80] sm:$0xf]
    %v137 = vld [vmem:[#allocation5 + $0x84] sm:$0xf]
    %v138 = vld [vmem:[#allocation5 + $0x88] sm:$0xf]
    %v139 = vld [vmem:[#allocation5 + $0x8c] sm:$0xf]
    %v140 = vld [vmem:[#allocation5 + $0x90] sm:$0xf]
    %v141 = vld [vmem:[#allocation5 + $0x94] sm:$0xf]
    %v142 = vld [vmem:[#allocation5 + $0x98] sm:$0xf]
    %v143 = vld [vmem:[#allocation5 + $0x9c] sm:$0xf]
    %v144 = vld [vmem:[#allocation5 + $0xa0] sm:$0xf]
    %v145 = vld [vmem:[#allocation5 + $0xa4] sm:$0xf]
    %v146 = vld [vmem:[#allocation5 + $0xa8] sm:$0xf]
    %v147 = vld [vmem:[#allocation5 + $0xac] sm:$0xf]
    %v148 = vld [vmem:[#allocation5 + $0xb0] sm:$0xf]
    %v149 = vld [vmem:[#allocation5 + $0xb4] sm:$0xf]
    %v150 = vld [vmem:[#allocation5 + $0xb8] sm:$0xf]
    %v151 = vld [vmem:[#allocation5 + $0xbc] sm:$0xf]
    %v152 = vld [vmem:[#allocation5 + $0xc0] sm:$0xf]
    %v153 = vld [vmem:[#allocation5 + $0xc4] sm:$0xf]
    %v154 = vld [vmem:[#allocation5 + $0xc8] sm:$0xf]
    %v155 = vld [vmem:[#allocation5 + $0xcc] sm:$0xf]
    %v156 = vld [vmem:[#allocation5 + $0xd0] sm:$0xf]
    %v157 = vld [vmem:[#allocation5 + $0xd4] sm:$0xf]
    %v158 = vld [vmem:[#allocation5 + $0xd8] sm:$0xf]
    %v159 = vld [vmem:[#allocation5 + $0xdc] sm:$0xf]
    %v160 = vld [vmem:[#allocation5 + $0xe0] sm:$0xf]
    %v161 = vld [vmem:[#allocation5 + $0xe4] sm:$0xf]
    %v162 = vld [vmem:[#allocation5 + $0xe8] sm:$0xf]
    %v163 = vld [vmem:[#allocation5 + $0xec] sm:$0xf]
    %v164 = vld [vmem:[#allocation5 + $0xf0] sm:$0xf]
    %v165 = vld [vmem:[#allocation5 + $0xf4] sm:$0xf]
    %v166 = vld [vmem:[#allocation5 + $0xf8] sm:$0xf]
    %v167 = vld [vmem:[#allocation5 + $0xfc] sm:$0xf]
    %v168 = vld [vmem:[#allocation5 + $0x100] sm:$0xf]
    %v169 = vld [vmem:[#allocation5 + $0x104] sm:$0xf]
    %v170 = vld [vmem:[#allocation5 + $0x108] sm:$0xf]
    %v171 = vld [vmem:[#allocation5 + $0x10c] sm:$0xf]
    %v172 = vld [vmem:[#allocation5 + $0x110] sm:$0xf]
    %v173 = vld [vmem:[#allocation5 + $0x114] sm:$0xf]
    %v174 = vld [vmem:[#allocation5 + $0x118] sm:$0xf]
    %v175 = vld [vmem:[#allocation5 + $0x11c] sm:$0xf]
    %v176 = vld [vmem:[#allocation5 + $0x120] sm:$0xf]
    %v177 = vld [vmem:[#allocation5 + $0x124] sm:$0xf]
    %v178 = vld [vmem:[#allocation5 + $0x128] sm:$0xf]
    %v179 = vld [vmem:[#allocation5 + $0x12c] sm:$0xf]
    %v180 = vld [vmem:[#allocation5 + $0x130] sm:$0xf]
    %v181 = vld [vmem:[#allocation5 + $0x134] sm:$0xf]
    %v182 = vld [vmem:[#allocation5 + $0x138] sm:$0xf]
    %v183 = vld [vmem:[#allocation5 + $0x13c] sm:$0xf]
    %v184 = vld [vmem:[#allocation5 + $0x140] sm:$0xf]
    %v185 = vld [vmem:[#allocation5 + $0x144] sm:$0xf]
    %v186 = vld [vmem:[#allocation5 + $0x148] sm:$0xf]
    %v187 = vld [vmem:[#allocation5 + $0x14c] sm:$0xf]
    %v188 = vld [vmem:[#allocation5 + $0x150] sm:$0xf]
    %v189 = vld [vmem:[#allocation5 + $0x154] sm:$0xf]
    %v190 = vld [vmem:[#allocation5 + $0x158] sm:$0xf]
    %v191 = vld [vmem:[#allocation5 + $0x15c] sm:$0xf]
    %v192 = vld [vmem:[#allocation5 + $0x160] sm:$0xf]
    %v193 = vld [vmem:[#allocation5 + $0x164] sm:$0xf]
    %v194 = vld [vmem:[#allocation5 + $0x168] sm:$0xf]
    %v195 = vld [vmem:[#allocation5 + $0x16c] sm:$0xf]
    %v196 = vld [vmem:[#allocation5 + $0x170] sm:$0xf]
    %v197 = vld [vmem:[#allocation5 + $0x174] sm:$0xf]
    %v198 = vld [vmem:[#allocation5 + $0x178] sm:$0xf]
    %v199 = vld [vmem:[#allocation5 + $0x17c] sm:$0xf]
    %v200 = vld [vmem:[#allocation5 + $0x180] sm:$0xf]
    %v201 = vld [vmem:[#allocation5 + $0x184] sm:$0xf]
    %v202 = vld [vmem:[%s2] sm:$0x1]
    %v204 = vlaneseq
    %v205 = vshrl.u32 %v204, 7
    %v206 = vsub.s32 0, %v205
    %v207 = vrot.slane %v202, %v206
    %v213 = vunpack.c.l.b16 %v100
    %v214 = vunpack.c.h.b16 %v100
    %v215 = vunpack.c.l.b16 %v101
    %v216 = vunpack.c.h.b16 %v101
    %v217 = vunpack.c.l.b16 %v102
    %v218 = vunpack.c.h.b16 %v102
    %v219 = vunpack.c.l.b16 %v103
    %v220 = vpack.c.b16 %v213, %v213
    %v221 = vpack.c.b16 %v214, %v214
    %v222 = vpack.c.b16 %v215, %v215
    %v223 = vpack.c.b16 %v216, %v216
    %v224 = vpack.c.b16 %v217, %v217
    %v225 = vpack.c.b16 %v218, %v218
    %v226 = vpack.c.b16 %v219, %v219
    %v331 = vunpack.c.l.b16 %v104
    %v332 = vunpack.c.l.b16 %v105
    %v333 = vunpack.c.l.b16 %v106
    %v334 = vunpack.c.l.b16 %v107
    %v335 = vunpack.c.l.b16 %v108
    %v336 = vunpack.c.l.b16 %v109
    %v337 = vunpack.c.l.b16 %v110
    %v338 = vunpack.c.l.b16 %v111
    %v339 = vunpack.c.l.b16 %v112
    %v340 = vunpack.c.l.b16 %v113
    %v341 = vunpack.c.l.b16 %v114
    %v342 = vunpack.c.l.b16 %v115
    %v343 = vunpack.c.l.b16 %v116
    %v344 = vunpack.c.l.b16 %v117
    %v345 = vunpack.c.l.b16 %v118
    %v346 = vunpack.c.l.b16 %v119
    %v347 = vunpack.c.l.b16 %v120
    %v348 = vunpack.c.l.b16 %v121
    %v349 = vunpack.c.l.b16 %v122
    %v350 = vunpack.c.l.b16 %v123
    %v351 = vunpack.c.l.b16 %v124
    %v352 = vunpack.c.l.b16 %v125
    %v353 = vunpack.c.l.b16 %v126
    %v354 = vunpack.c.l.b16 %v127
    %v355 = vunpack.c.l.b16 %v128
    %v356 = vunpack.c.l.b16 %v129
    %v357 = vunpack.c.l.b16 %v130
    %v358 = vunpack.c.l.b16 %v131
    %v359 = vunpack.c.l.b16 %v132
    %v360 = vunpack.c.l.b16 %v133
    %v361 = vunpack.c.l.b16 %v134
    %v362 = vunpack.c.l.b16 %v135
    %v363 = vunpack.c.l.b16 %v136
    %v364 = vunpack.c.l.b16 %v137
    %v365 = vunpack.c.l.b16 %v138
    %v366 = vunpack.c.l.b16 %v139
    %v367 = vunpack.c.l.b16 %v140
    %v368 = vunpack.c.l.b16 %v141
    %v369 = vunpack.c.l.b16 %v142
    %v370 = vunpack.c.l.b16 %v143
    %v371 = vunpack.c.l.b16 %v144
    %v372 = vunpack.c.l.b16 %v145
    %v373 = vunpack.c.l.b16 %v146
    %v374 = vunpack.c.l.b16 %v147
    %v375 = vunpack.c.l.b16 %v148
    %v376 = vunpack.c.l.b16 %v149
    %v377 = vunpack.c.l.b16 %v150
    %v378 = vunpack.c.l.b16 %v151
    %v379 = vunpack.c.l.b16 %v152
    %v380 = vunpack.c.l.b16 %v153
    %v381 = vunpack.c.l.b16 %v154
    %v382 = vunpack.c.l.b16 %v155
    %v383 = vunpack.c.l.b16 %v156
    %v384 = vunpack.c.l.b16 %v157
    %v385 = vunpack.c.l.b16 %v158
    %v386 = vunpack.c.l.b16 %v159
    %v387 = vunpack.c.l.b16 %v160
    %v388 = vunpack.c.l.b16 %v161
    %v389 = vunpack.c.l.b16 %v162
    %v390 = vunpack.c.l.b16 %v163
    %v391 = vunpack.c.l.b16 %v164
    %v392 = vunpack.c.l.b16 %v165
    %v393 = vunpack.c.l.b16 %v166
    %v394 = vunpack.c.l.b16 %v167
    %v395 = vunpack.c.l.b16 %v168
    %v396 = vunpack.c.l.b16 %v169
    %v397 = vunpack.c.l.b16 %v170
    %v398 = vunpack.c.l.b16 %v171
    %v399 = vunpack.c.l.b16 %v172
    %v400 = vunpack.c.l.b16 %v173
    %v401 = vunpack.c.l.b16 %v174
    %v402 = vunpack.c.l.b16 %v175
    %v403 = vunpack.c.l.b16 %v176
    %v404 = vunpack.c.l.b16 %v177
    %v405 = vunpack.c.l.b16 %v178
    %v406 = vunpack.c.l.b16 %v179
    %v407 = vunpack.c.l.b16 %v180
    %v408 = vunpack.c.l.b16 %v181
    %v409 = vunpack.c.l.b16 %v182
    %v410 = vunpack.c.l.b16 %v183
    %v411 = vunpack.c.l.b16 %v184
    %v412 = vunpack.c.l.b16 %v185
    %v413 = vunpack.c.l.b16 %v186
    %v414 = vunpack.c.l.b16 %v187
    %v415 = vunpack.c.l.b16 %v188
    %v416 = vunpack.c.l.b16 %v189
    %v417 = vunpack.c.l.b16 %v190
    %v418 = vunpack.c.l.b16 %v191
    %v419 = vunpack.c.l.b16 %v192
    %v420 = vunpack.c.l.b16 %v193
    %v421 = vunpack.c.l.b16 %v194
    %v422 = vunpack.c.l.b16 %v195
    %v423 = vunpack.c.l.b16 %v196
    %v424 = vunpack.c.l.b16 %v197
    %v425 = vunpack.c.l.b16 %v198
    %v426 = vunpack.c.l.b16 %v199
    %v427 = vunpack.c.l.b16 %v200
    %v428 = vunpack.c.l.b16 %v201
    %v429 = vpack.c.b16 %v332, %v331
    %v430 = vpack.c.b16 %v334, %v333
    %v431 = vpack.c.b16 %v336, %v335
    %v432 = vpack.c.b16 %v338, %v337
    %v433 = vpack.c.b16 %v340, %v339
    %v434 = vpack.c.b16 %v342, %v341
    %v435 = vpack.c.b16 %v344, %v343
    %v436 = vpack.c.b16 %v346, %v345
    %v437 = vpack.c.b16 %v348, %v347
    %v438 = vpack.c.b16 %v350, %v349
    %v439 = vpack.c.b16 %v352, %v351
    %v440 = vpack.c.b16 %v354, %v353
    %v441 = vpack.c.b16 %v356, %v355
    %v442 = vpack.c.b16 %v358, %v357
    %v443 = vpack.c.b16 %v360, %v359
    %v444 = vpack.c.b16 %v362, %v361
    %v445 = vpack.c.b16 %v364, %v363
    %v446 = vpack.c.b16 %v366, %v365
    %v447 = vpack.c.b16 %v368, %v367
    %v448 = vpack.c.b16 %v370, %v369
    %v449 = vpack.c.b16 %v372, %v371
    %v450 = vpack.c.b16 %v374, %v373
    %v451 = vpack.c.b16 %v376, %v375
    %v452 = vpack.c.b16 %v378, %v377
    %v453 = vpack.c.b16 %v380, %v379
    %v454 = vpack.c.b16 %v382, %v381
    %v455 = vpack.c.b16 %v384, %v383
    %v456 = vpack.c.b16 %v386, %v385
    %v457 = vpack.c.b16 %v388, %v387
    %v458 = vpack.c.b16 %v390, %v389
    %v459 = vpack.c.b16 %v392, %v391
    %v460 = vpack.c.b16 %v394, %v393
    %v461 = vpack.c.b16 %v396, %v395
    %v462 = vpack.c.b16 %v398, %v397
    %v463 = vpack.c.b16 %v400, %v399
    %v464 = vpack.c.b16 %v402, %v401
    %v465 = vpack.c.b16 %v404, %v403
    %v466 = vpack.c.b16 %v406, %v405
    %v467 = vpack.c.b16 %v408, %v407
    %v468 = vpack.c.b16 %v410, %v409
    %v469 = vpack.c.b16 %v412, %v411
    %v470 = vpack.c.b16 %v414, %v413
    %v471 = vpack.c.b16 %v416, %v415
    %v472 = vpack.c.b16 %v418, %v417
    %v473 = vpack.c.b16 %v420, %v419
    %v474 = vpack.c.b16 %v422, %v421
    %v475 = vpack.c.b16 %v424, %v423
    %v476 = vpack.c.b16 %v426, %v425
    %v477 = vpack.c.b16 %v428, %v427
    %vm527 = vcmask 130048
    %v529 = vsel %vm527, %v226, 0
    %531 = vmatprep.subr.bf16.mxu0 0
    %532 = vmatpush1.bf16.msra.mxu0 %v429
    %533 = vmatprep.subr.bf16.mxu0 0
    %534 = vmatpush1.bf16.msra.mxu0 %v430
    %535 = vmatprep.subr.bf16.mxu0 0
    %536 = vmatpush1.bf16.msra.mxu0 %v431
    %537 = vmatprep.subr.bf16.mxu0 0
    %538 = vmatpush1.bf16.msra.mxu0 %v432
    %539 = vmatprep.subr.bf16.mxu0 0
    %540 = vmatpush1.bf16.msra.mxu0 %v433
    %541 = vmatprep.subr.bf16.mxu0 0
    %542 = vmatpush1.bf16.msra.mxu0 %v434
    %543 = vmatprep.subr.bf16.mxu0 0
    %544 = vmatpush1.bf16.msra.mxu0 %v435
    %545 = vmatprep.subr.bf16.mxu0 0
    %546 = vmatpush1.bf16.msra.mxu0 %v436
    %547 = vmatprep.subr.bf16.mxu0 0
    %548 = vmatpush1.bf16.msra.mxu0 %v437
    %549 = vmatprep.subr.bf16.mxu0 0
    %550 = vmatpush1.bf16.msra.mxu0 %v438
    %551 = vmatprep.subr.bf16.mxu0 0
    %552 = vmatpush1.bf16.msra.mxu0 %v439
    %553 = vmatprep.subr.bf16.mxu0 0
    %554 = vmatpush1.bf16.msra.mxu0 %v440
    %555 = vmatprep.subr.bf16.mxu0 0
    %556 = vmatpush1.bf16.msra.mxu0 %v441
    %557 = vmatprep.subr.bf16.mxu0 0
    %558 = vmatpush1.bf16.msra.mxu0 %v442
    %559 = vmatprep.subr.bf16.mxu0 0
    %560 = vmatpush1.bf16.msra.mxu0 %v443
    %561 = vmatprep.subr.bf16.mxu0 0
    %562 = vmatpush1.bf16.msra.mxu0 %v444
    %563 = vmatprep.mubr.bf16.mxu0 %v221
    %564 = vmatmul.mubr.bf16.gmra.mrb[0].mxu0 %v220
    %v565 = vpop.f32.mrb[0].mxu0
    %v566 = vadd.f32 %v207, %v565
    %v567 = vpop.f32.mrb[0].mxu0
    %v568 = vpop.f32.mrb[0].mxu0
    %v569 = vpop.f32.mrb[0].mxu0
    %570 = vdwg.mxu0
    %571 = vmatprep.subr.bf16.mxu0 0
    %572 = vmatpush1.bf16.msra.mxu0 %v445
    %573 = vmatprep.subr.bf16.mxu0 0
    %574 = vmatpush1.bf16.msra.mxu0 %v446
    %575 = vmatprep.subr.bf16.mxu0 0
    %576 = vmatpush1.bf16.msra.mxu0 %v447
    %577 = vmatprep.subr.bf16.mxu0 0
    %578 = vmatpush1.bf16.msra.mxu0 %v448
    %579 = vmatprep.subr.bf16.mxu0 0
    %580 = vmatpush1.bf16.msra.mxu0 %v449
    %581 = vmatprep.subr.bf16.mxu0 0
    %582 = vmatpush1.bf16.msra.mxu0 %v450
    %583 = vmatprep.subr.bf16.mxu0 0
    %584 = vmatpush1.bf16.msra.mxu0 %v451
    %585 = vmatprep.subr.bf16.mxu0 0
    %586 = vmatpush1.bf16.msra.mxu0 %v452
    %587 = vmatprep.subr.bf16.mxu0 0
    %588 = vmatpush1.bf16.msra.mxu0 %v453
    %589 = vmatprep.subr.bf16.mxu0 0
    %590 = vmatpush1.bf16.msra.mxu0 %v454
    %591 = vmatprep.subr.bf16.mxu0 0
    %592 = vmatpush1.bf16.msra.mxu0 %v455
    %593 = vmatprep.subr.bf16.mxu0 0
    %594 = vmatpush1.bf16.msra.mxu0 %v456
    %595 = vmatprep.subr.bf16.mxu0 0
    %596 = vmatpush1.bf16.msra.mxu0 %v457
    %597 = vmatprep.subr.bf16.mxu0 0
    %598 = vmatpush1.bf16.msra.mxu0 %v458
    %599 = vmatprep.subr.bf16.mxu0 0
    %600 = vmatpush1.bf16.msra.mxu0 %v459
    %601 = vmatprep.subr.bf16.mxu0 0
    %602 = vmatpush1.bf16.msra.mxu0 %v460
    %603 = vmatprep.mubr.bf16.mxu0 %v223
    %604 = vmatmul.mubr.bf16.gmra.mrb[0].mxu0 %v222
    %v605 = vpop.f32.mrb[0].mxu0
    %v606 = vadd.f32 %v566, %v605
    %v607 = vpop.f32.mrb[0].mxu0
    %v608 = vpop.f32.mrb[0].mxu0
    %v609 = vpop.f32.mrb[0].mxu0
    %610 = vdwg.mxu0
    %611 = vmatprep.subr.bf16.mxu0 0
    %612 = vmatpush1.bf16.msra.mxu0 %v461
    %613 = vmatprep.subr.bf16.mxu0 0
    %614 = vmatpush1.bf16.msra.mxu0 %v462
    %615 = vmatprep.subr.bf16.mxu0 0
    %616 = vmatpush1.bf16.msra.mxu0 %v463
    %617 = vmatprep.subr.bf16.mxu0 0
    %618 = vmatpush1.bf16.msra.mxu0 %v464
    %619 = vmatprep.subr.bf16.mxu0 0
    %620 = vmatpush1.bf16.msra.mxu0 %v465
    %621 = vmatprep.subr.bf16.mxu0 0
    %622 = vmatpush1.bf16.msra.mxu0 %v466
    %623 = vmatprep.subr.bf16.mxu0 0
    %624 = vmatpush1.bf16.msra.mxu0 %v467
    %625 = vmatprep.subr.bf16.mxu0 0
    %626 = vmatpush1.bf16.msra.mxu0 %v468
    %627 = vmatprep.subr.bf16.mxu0 0
    %628 = vmatpush1.bf16.msra.mxu0 %v469
    %629 = vmatprep.subr.bf16.mxu0 0
    %630 = vmatpush1.bf16.msra.mxu0 %v470
    %631 = vmatprep.subr.bf16.mxu0 0
    %632 = vmatpush1.bf16.msra.mxu0 %v471
    %633 = vmatprep.subr.bf16.mxu0 0
    %634 = vmatpush1.bf16.msra.mxu0 %v472
    %635 = vmatprep.subr.bf16.mxu0 0
    %636 = vmatpush1.bf16.msra.mxu0 %v473
    %637 = vmatprep.subr.bf16.mxu0 0
    %638 = vmatpush1.bf16.msra.mxu0 %v474
    %639 = vmatprep.subr.bf16.mxu0 0
    %640 = vmatpush1.bf16.msra.mxu0 %v475
    %641 = vmatprep.subr.bf16.mxu0 0
    %642 = vmatpush1.bf16.msra.mxu0 %v476
    %643 = vmatprep.mubr.bf16.mxu0 %v225
    %644 = vmatmul.mubr.bf16.gmra.mrb[0].mxu0 %v224
    %v645 = vpop.f32.mrb[0].mxu0
    %v646 = vadd.f32 %v606, %v645
    %v647 = vpop.f32.mrb[0].mxu0
    %v648 = vpop.f32.mrb[0].mxu0
    %v649 = vpop.f32.mrb[0].mxu0
    %650 = vdwg.mxu0
    %651 = vmatprep.subr.bf16.mxu0 0
    %652 = vmatpush1.bf16.msra.mxu0 %v477
    %653 = vmatprep.subr.bf16.mxu0 0
    %654 = vmatpush1.bf16.msra.mxu0 0
    %655 = vmatprep.subr.bf16.mxu0 0
    %656 = vmatpush1.bf16.msra.mxu0 0
    %657 = vmatprep.subr.bf16.mxu0 0
    %658 = vmatpush1.bf16.msra.mxu0 0
    %659 = vmatprep.subr.bf16.mxu0 0
    %660 = vmatpush1.bf16.msra.mxu0 0
    %661 = vmatprep.subr.bf16.mxu0 0
    %662 = vmatpush1.bf16.msra.mxu0 0
    %663 = vmatprep.subr.bf16.mxu0 0
    %664 = vmatpush1.bf16.msra.mxu0 0
    %665 = vmatprep.subr.bf16.mxu0 0
    %666 = vmatpush1.bf16.msra.mxu0 0
    %667 = vmatprep.subr.bf16.mxu0 0
    %668 = vmatpush1.bf16.msra.mxu0 0
    %669 = vmatprep.subr.bf16.mxu0 0
    %670 = vmatpush1.bf16.msra.mxu0 0
    %671 = vmatprep.subr.bf16.mxu0 0
    %672 = vmatpush1.bf16.msra.mxu0 0
    %673 = vmatprep.subr.bf16.mxu0 0
    %674 = vmatpush1.bf16.msra.mxu0 0
    %675 = vmatprep.subr.bf16.mxu0 0
    %676 = vmatpush1.bf16.msra.mxu0 0
    %677 = vmatprep.subr.bf16.mxu0 0
    %678 = vmatpush1.bf16.msra.mxu0 0
    %679 = vmatprep.subr.bf16.mxu0 0
    %680 = vmatpush1.bf16.msra.mxu0 0
    %681 = vmatprep.subr.bf16.mxu0 0
    %682 = vmatpush1.bf16.msra.mxu0 0
    %683 = vmatprep.mubr.bf16.mxu0 0
    %684 = vmatmul.mubr.bf16.gmra.mrb[0].mxu0 %v529
    %v685 = vpop.f32.mrb[0].mxu0
    %v686 = vadd.f32 %v646, %v685
    %v687 = vpop.f32.mrb[0].mxu0
    %v688 = vpop.f32.mrb[0].mxu0
    %v689 = vpop.f32.mrb[0].mxu0
    %690 = vdwg.mxu0
    %v691 = vmax.f32 %v686, 0.0
    %v692 = vpack.c.bf16 %v691, %v691
    %v693 = vld [vmem:[#allocation7] sm:$0xf]
    %v694 = vld [vmem:[#allocation7 + $0x4] sm:$0xf]
    %v695 = vld [vmem:[#allocation7 + $0x8] sm:$0xf]
    %v696 = vld [vmem:[#allocation7 + $0xc] sm:$0xf]
    %v697 = vld [vmem:[#allocation7 + $0x10] sm:$0xf]
    %v698 = vld [vmem:[#allocation7 + $0x14] sm:$0xf]
    %v699 = vld [vmem:[#allocation7 + $0x18] sm:$0xf]
    %v700 = vld [vmem:[#allocation7 + $0x1c] sm:$0xf]
    %v701 = vld [vmem:[#allocation7 + $0x20] sm:$0xf]
    %v702 = vld [vmem:[#allocation7 + $0x24] sm:$0xf]
    %v703 = vld [vmem:[#allocation7 + $0x28] sm:$0xf]
    %v704 = vld [vmem:[#allocation7 + $0x2c] sm:$0xf]
    %v705 = vld [vmem:[#allocation7 + $0x30] sm:$0xf]
    %v706 = vld [vmem:[#allocation7 + $0x34] sm:$0xf]
    %v707 = vld [vmem:[#allocation7 + $0x38] sm:$0xf]
    %v708 = vld [vmem:[#allocation7 + $0x3c] sm:$0xf]
    %v709 = vld [vmem:[%s4] sm:$0x1]
    %v711 = vlaneseq
    %v712 = vshrl.u32 %v711, 7
    %v713 = vsub.s32 0, %v712
    %v714 = vrot.slane %v709, %v713
    %v732 = vunpack.c.l.b16 %v693
    %v733 = vunpack.c.l.b16 %v694
    %v734 = vunpack.c.l.b16 %v695
    %v735 = vunpack.c.l.b16 %v696
    %v736 = vunpack.c.l.b16 %v697
    %v737 = vunpack.c.l.b16 %v698
    %v738 = vunpack.c.l.b16 %v699
    %v739 = vunpack.c.l.b16 %v700
    %v740 = vunpack.c.l.b16 %v701
    %v741 = vunpack.c.l.b16 %v702
    %v742 = vunpack.c.l.b16 %v703
    %v743 = vunpack.c.l.b16 %v704
    %v744 = vunpack.c.l.b16 %v705
    %v745 = vunpack.c.l.b16 %v706
    %v746 = vunpack.c.l.b16 %v707
    %v747 = vunpack.c.l.b16 %v708
    %v748 = vpack.c.b16 %v733, %v732
    %v749 = vpack.c.b16 %v735, %v734
    %v750 = vpack.c.b16 %v737, %v736
    %v751 = vpack.c.b16 %v739, %v738
    %v752 = vpack.c.b16 %v741, %v740
    %v753 = vpack.c.b16 %v743, %v742
    %v754 = vpack.c.b16 %v745, %v744
    %v755 = vpack.c.b16 %v747, %v746
    %764 = vmatprep.subr.bf16.mxu0 0
    %765 = vmatpush1.bf16.msra.mxu0 %v748
    %766 = vmatprep.subr.bf16.mxu0 0
    %767 = vmatpush1.bf16.msra.mxu0 %v749
    %768 = vmatprep.subr.bf16.mxu0 0
    %769 = vmatpush1.bf16.msra.mxu0 %v750
    %770 = vmatprep.subr.bf16.mxu0 0
    %771 = vmatpush1.bf16.msra.mxu0 %v751
    %772 = vmatprep.subr.bf16.mxu0 0
    %773 = vmatpush1.bf16.msra.mxu0 %v752
    %774 = vmatprep.subr.bf16.mxu0 0
    %775 = vmatpush1.bf16.msra.mxu0 %v753
    %776 = vmatprep.subr.bf16.mxu0 0
    %777 = vmatpush1.bf16.msra.mxu0 %v754
    %778 = vmatprep.subr.bf16.mxu0 0
    %779 = vmatpush1.bf16.msra.mxu0 %v755
    %780 = vmatprep.subr.bf16.mxu0 0
    %781 = vmatpush1.bf16.msra.mxu0 0
    %782 = vmatprep.subr.bf16.mxu0 0
    %783 = vmatpush1.bf16.msra.mxu0 0
    %784 = vmatprep.subr.bf16.mxu0 0
    %785 = vmatpush1.bf16.msra.mxu0 0
    %786 = vmatprep.subr.bf16.mxu0 0
    %787 = vmatpush1.bf16.msra.mxu0 0
    %788 = vmatprep.subr.bf16.mxu0 0
    %789 = vmatpush1.bf16.msra.mxu0 0
    %790 = vmatprep.subr.bf16.mxu0 0
    %791 = vmatpush1.bf16.msra.mxu0 0
    %792 = vmatprep.subr.bf16.mxu0 0
    %793 = vmatpush1.bf16.msra.mxu0 0
    %794 = vmatprep.subr.bf16.mxu0 0
    %795 = vmatpush1.bf16.msra.mxu0 0
    %796 = vmatprep.mubr.bf16.mxu0 0
    %797 = vmatmul.mubr.bf16.gmra.mrb[0].mxu0 %v692
    %v798 = vpop.f32.mrb[0].mxu0
    %v799 = vadd.f32 %v714, %v798
    %v800 = vpop.f32.mrb[0].mxu0
    %v801 = vpop.f32.mrb[0].mxu0
    %v802 = vpop.f32.mrb[0].mxu0
    %803 = vdwg.mxu0
    %v804 = vmax.f32 %v799, 0.0
    %v805 = vpack.c.bf16 %v804, %v804
    %v806 = vld [vmem:[#allocation8] sm:$0xf]
    %v807 = vld [vmem:[#allocation8 + $0x4] sm:$0xf]
    %v808 = vld [vmem:[#allocation8 + $0x8] sm:$0xf]
    %v809 = vld [vmem:[#allocation8 + $0xc] sm:$0xf]
    %v810 = vld [vmem:[#allocation8 + $0x10] sm:$0xf]
    %v811 = vld [vmem:[#allocation8 + $0x14] sm:$0xf]
    %v812 = vld [vmem:[#allocation8 + $0x18] sm:$0xf]
    %v813 = vld [vmem:[#allocation8 + $0x1c] sm:$0xf]
    %v814 = vld [vmem:[#allocation8 + $0x20] sm:$0xf]
    %v815 = vld [vmem:[#allocation8 + $0x24] sm:$0xf]
    %v816 = vld [vmem:[#allocation8 + $0x28] sm:$0xf]
    %v817 = vld [vmem:[#allocation8 + $0x2c] sm:$0xf]
    %v818 = vld [vmem:[#allocation8 + $0x30] sm:$0xf]
    %v819 = vld [vmem:[#allocation8 + $0x34] sm:$0xf]
    %v820 = vld [vmem:[#allocation8 + $0x38] sm:$0xf]
    %v821 = vld [vmem:[#allocation8 + $0x3c] sm:$0xf]
    %v822 = vld [vmem:[%s6] sm:$0x1]
    %v824 = vlaneseq
    %v825 = vshrl.u32 %v824, 7
    %v826 = vsub.s32 0, %v825
    %v827 = vrot.slane %v822, %v826
    %v845 = vunpack.c.l.b16 %v806
    %v846 = vunpack.c.l.b16 %v807
    %v847 = vunpack.c.l.b16 %v808
    %v848 = vunpack.c.l.b16 %v809
    %v849 = vunpack.c.l.b16 %v810
    %v850 = vunpack.c.l.b16 %v811
    %v851 = vunpack.c.l.b16 %v812
    %v852 = vunpack.c.l.b16 %v813
    %v853 = vunpack.c.l.b16 %v814
    %v854 = vunpack.c.l.b16 %v815
    %v855 = vunpack.c.l.b16 %v816
    %v856 = vunpack.c.l.b16 %v817
    %v857 = vunpack.c.l.b16 %v818
    %v858 = vunpack.c.l.b16 %v819
    %v859 = vunpack.c.l.b16 %v820
    %v860 = vunpack.c.l.b16 %v821
    %v861 = vpack.c.b16 %v846, %v845
    %v862 = vpack.c.b16 %v848, %v847
    %v863 = vpack.c.b16 %v850, %v849
    %v864 = vpack.c.b16 %v852, %v851
    %v865 = vpack.c.b16 %v854, %v853
    %v866 = vpack.c.b16 %v856, %v855
    %v867 = vpack.c.b16 %v858, %v857
    %v868 = vpack.c.b16 %v860, %v859
    %877 = vmatprep.subr.bf16.mxu0 0
    %878 = vmatpush1.bf16.msra.mxu0 %v861
    %879 = vmatprep.subr.bf16.mxu0 0
    %880 = vmatpush1.bf16.msra.mxu0 %v862
    %881 = vmatprep.subr.bf16.mxu0 0
    %882 = vmatpush1.bf16.msra.mxu0 %v863
    %883 = vmatprep.subr.bf16.mxu0 0
    %884 = vmatpush1.bf16.msra.mxu0 %v864
    %885 = vmatprep.subr.bf16.mxu0 0
    %886 = vmatpush1.bf16.msra.mxu0 %v865
    %887 = vmatprep.subr.bf16.mxu0 0
    %888 = vmatpush1.bf16.msra.mxu0 %v866
    %889 = vmatprep.subr.bf16.mxu0 0
    %890 = vmatpush1.bf16.msra.mxu0 %v867
    %891 = vmatprep.subr.bf16.mxu0 0
    %892 = vmatpush1.bf16.msra.mxu0 %v868
    %893 = vmatprep.subr.bf16.mxu0 0
    %894 = vmatpush1.bf16.msra.mxu0 0
    %895 = vmatprep.subr.bf16.mxu0 0
    %896 = vmatpush1.bf16.msra.mxu0 0
    %897 = vmatprep.subr.bf16.mxu0 0
    %898 = vmatpush1.bf16.msra.mxu0 0
    %899 = vmatprep.subr.bf16.mxu0 0
    %900 = vmatpush1.bf16.msra.mxu0 0
    %901 = vmatprep.subr.bf16.mxu0 0
    %902 = vmatpush1.bf16.msra.mxu0 0
    %903 = vmatprep.subr.bf16.mxu0 0
    %904 = vmatpush1.bf16.msra.mxu0 0
    %905 = vmatprep.subr.bf16.mxu0 0
    %906 = vmatpush1.bf16.msra.mxu0 0
    %907 = vmatprep.subr.bf16.mxu0 0
    %908 = vmatpush1.bf16.msra.mxu0 0
    %909 = vmatprep.mubr.bf16.mxu0 0
    %910 = vmatmul.mubr.bf16.gmra.mrb[0].mxu0 %v805
    %v911 = vpop.f32.mrb[0].mxu0
    %v912 = vadd.f32 %v827, %v911
    %v913 = vpop.f32.mrb[0].mxu0
    %v914 = vpop.f32.mrb[0].mxu0
    %v915 = vpop.f32.mrb[0].mxu0
    %916 = vdwg.mxu0
    %v917 = vmax.f32 %v912, 0.0
    %v918 = vpack.c.bf16 %v917, %v917
    %v919 = vld [vmem:[#allocation10] sm:$0xf]
    %v920 = vld [vmem:[#allocation10 + $0x4] sm:$0xf]
    %v921 = vld [vmem:[#allocation10 + $0x8] sm:$0xf]
    %v922 = vld [vmem:[#allocation10 + $0xc] sm:$0xf]
    %v923 = vld [vmem:[#allocation10 + $0x10] sm:$0xf]
    %v924 = vld [vmem:[#allocation10 + $0x14] sm:$0xf]
    %v925 = vld [vmem:[#allocation10 + $0x18] sm:$0xf]
    %v926 = vld [vmem:[#allocation10 + $0x1c] sm:$0xf]
    %v927 = vld [vmem:[#allocation10 + $0x20] sm:$0xf]
    %v928 = vld [vmem:[#allocation10 + $0x24] sm:$0xf]
    %v929 = vld [vmem:[#allocation10 + $0x28] sm:$0xf]
    %v930 = vld [vmem:[#allocation10 + $0x2c] sm:$0xf]
    %v931 = vld [vmem:[#allocation10 + $0x30] sm:$0xf]
    %v932 = vld [vmem:[#allocation10 + $0x34] sm:$0xf]
    %v933 = vld [vmem:[#allocation10 + $0x38] sm:$0xf]
    %v934 = vld [vmem:[#allocation10 + $0x3c] sm:$0xf]
    %v935 = vld [vmem:[%s8] sm:$0x1]
    %v937 = vlaneseq
    %v938 = vshrl.u32 %v937, 7
    %v939 = vsub.s32 0, %v938
    %v940 = vrot.slane %v935, %v939
    %v958 = vunpack.c.l.b16 %v919
    %v959 = vunpack.c.l.b16 %v920
    %v960 = vunpack.c.l.b16 %v921
    %v961 = vunpack.c.l.b16 %v922
    %v962 = vunpack.c.l.b16 %v923
    %v963 = vunpack.c.l.b16 %v924
    %v964 = vunpack.c.l.b16 %v925
    %v965 = vunpack.c.l.b16 %v926
    %v966 = vunpack.c.l.b16 %v927
    %v967 = vunpack.c.l.b16 %v928
    %v968 = vunpack.c.l.b16 %v929
    %v969 = vunpack.c.l.b16 %v930
    %v970 = vunpack.c.l.b16 %v931
    %v971 = vunpack.c.l.b16 %v932
    %v972 = vunpack.c.l.b16 %v933
    %v973 = vunpack.c.l.b16 %v934
    %v974 = vpack.c.b16 %v959, %v958
    %v975 = vpack.c.b16 %v961, %v960
    %v976 = vpack.c.b16 %v963, %v962
    %v977 = vpack.c.b16 %v965, %v964
    %v978 = vpack.c.b16 %v967, %v966
    %v979 = vpack.c.b16 %v969, %v968
    %v980 = vpack.c.b16 %v971, %v970
    %v981 = vpack.c.b16 %v973, %v972
    %990 = vmatprep.subr.bf16.mxu0 0
    %991 = vmatpush1.bf16.msra.mxu0 %v974
    %992 = vmatprep.subr.bf16.mxu0 0
    %993 = vmatpush1.bf16.msra.mxu0 %v975
    %994 = vmatprep.subr.bf16.mxu0 0
    %995 = vmatpush1.bf16.msra.mxu0 %v976
    %996 = vmatprep.subr.bf16.mxu0 0
    %997 = vmatpush1.bf16.msra.mxu0 %v977
    %998 = vmatprep.subr.bf16.mxu0 0
    %999 = vmatpush1.bf16.msra.mxu0 %v978
    %1000 = vmatprep.subr.bf16.mxu0 0
    %1001 = vmatpush1.bf16.msra.mxu0 %v979
    %1002 = vmatprep.subr.bf16.mxu0 0
    %1003 = vmatpush1.bf16.msra.mxu0 %v980
    %1004 = vmatprep.subr.bf16.mxu0 0
    %1005 = vmatpush1.bf16.msra.mxu0 %v981
    %1006 = vmatprep.subr.bf16.mxu0 0
    %1007 = vmatpush1.bf16.msra.mxu0 0
    %1008 = vmatprep.subr.bf16.mxu0 0
    %1009 = vmatpush1.bf16.msra.mxu0 0
    %1010 = vmatprep.subr.bf16.mxu0 0
    %1011 = vmatpush1.bf16.msra.mxu0 0
    %1012 = vmatprep.subr.bf16.mxu0 0
    %1013 = vmatpush1.bf16.msra.mxu0 0
    %1014 = vmatprep.subr.bf16.mxu0 0
    %1015 = vmatpush1.bf16.msra.mxu0 0
    %1016 = vmatprep.subr.bf16.mxu0 0
    %1017 = vmatpush1.bf16.msra.mxu0 0
    %1018 = vmatprep.subr.bf16.mxu0 0
    %1019 = vmatpush1.bf16.msra.mxu0 0
    %1020 = vmatprep.subr.bf16.mxu0 0
    %1021 = vmatpush1.bf16.msra.mxu0 0
    %1022 = vmatprep.mubr.bf16.mxu0 0
    %1023 = vmatmul.mubr.bf16.gmra.mrb[0].mxu0 %v918
    %v1024 = vpop.f32.mrb[0].mxu0
    %v1025 = vadd.f32 %v940, %v1024
    %v1026 = vpop.f32.mrb[0].mxu0
    %v1027 = vpop.f32.mrb[0].mxu0
    %v1028 = vpop.f32.mrb[0].mxu0
    %1029 = vdwg.mxu0
    %1030 = vmax.xlane.f32.xlu0 %v1025
    %v1031 = vpop.xlane.xlu0 %1030
    %v1032 = vsub.f32 %v1025, %v1031
    %v1033 = vmul.f32 %v1032, 1.442695
    %v1034 = vpow.pop %v1033
    %1035 = vadd.xlane.f32.xlu0 %v1034
    %v1036 = vpop.xlane.xlu0 %1035
    %v1037 = vlog2.pop %v1036
    %v1038 = vmul.f32 %v1037, 0.6931472
    %v1039 = vsub.f32 %v1032, %v1038
    %1040 = vst [vmem:[#allocation11] sm:$0xff] %v1039
    // Predicated region
    $region58: #{tpu_custom_call.1} parent=1 // pred_check
      _
    $region59: #{tpu_custom_call.1} parent=1 // pred_check_branch
      %1042 = sbr.rel (0) target = $region61
    $region60: #{tpu_custom_call.1} parent=1 // pred_region
      %s1044 = ssub.s32 128, 128
      %1045 = vsyncadd [#allocation4], %s1044
      %s1047 = sshll.u32 [#allocation11], 4
      %s1048 = int_to_ptr.vmem [resolvable:$true] %s1047
      %1050 = dma.vmem_to_hbm [thread:$0]  %s1048, 128, %s9, [#allocation4]
    $region61: #{tpu_custom_call.1} parent=1 // pred_fallthru
      _
    // Predicated region
    $region62: #{tpu_custom_call.1} parent=1 // pred_check
      _
    $region63: #{tpu_custom_call.1} parent=1 // pred_check_branch
      %1052 = sbr.rel (0) target = $region65
    $region64: #{tpu_custom_call.1} parent=1 // pred_region
      %1053 = dma.done [#allocation4], 128
    $region65: #{tpu_custom_call.1} parent=1 // pred_fallthru
      _
    %1054 = vsyncpa [#allocation3], 1
    %1055 = vsyncpa [#allocation6], 1
    %1056 = vsyncpa [#allocation9], 1
    %1057 = vsyncpa [#allocation4], 1

</llo_original>
